<compile_context>
chip_gen: v6e
topology: v6e:2x2x1
jax: 0.10.0
libtpu: 0.0.40
codegen_flags: <defaults>
</compile_context>

<pallas_src>
import functools

import jax
import jax.numpy as jnp
import numpy as np
from jax import lax
from jax.experimental import pallas as pl
from jax.experimental.pallas import tpu as pltpu

_EPS = 1e-5


def _edge_masks(H, W, HWp):
    """(8, HWp) f32 masks, flattened (h, w) on the lane axis, zero on the pad.

    row 0: col_left  -- tap reads x[h, w-1]      (w > 0)
    row 1: col_right -- tap reads x[h, w+1]      (w < W-1)
    row 2: row_top   -- contribution from h-1    (h > 0)
    row 3: row_bot   -- contribution from h+1    (h < H-1)
    row 4: valid     -- flat index < H*W         (spatial-pad mask, stats pass)
    rows 5-7: unused (sublane padding to 8)
    """
    HW = H * W
    rows = np.repeat(np.arange(H), W)
    cols = np.tile(np.arange(W), H)
    m = np.zeros((8, HWp), np.float32)
    m[0, :HW] = cols > 0
    m[1, :HW] = cols < W - 1
    m[2, :HW] = rows > 0
    m[3, :HW] = rows < H - 1
    m[4, :HW] = 1.0
    return m


def _dwconv(x, p, m_ref, W):
    """Depthwise 3x3 conv (stride 1, zero pad 1) on one flattened (Cb, HWp) tile.

    Separable shift structure: 4 pltpu.roll (XLU) + 4 mask multiplies total,
    9 tap multiplies.  x: (Cb, HWp) f32, channels on sublanes, pixels on lanes.
    p: (Cb, 12) f32, cols 0..8 taps (k = (dh+1)*3 + (dw+1)), col 9 bias.
    """
    HWp = x.shape[1]
    col_l = m_ref[0:1, :]
    col_r = m_ref[1:2, :]
    row_t = m_ref[2:3, :]
    row_b = m_ref[3:4, :]

    # Column neighbours (lane rolls + column-edge masks), built once.
    xm1 = pltpu.roll(x, shift=1, axis=1) * col_l          # x[h, w-1]
    xp1 = pltpu.roll(x, shift=HWp - 1, axis=1) * col_r    # x[h, w+1]

    # Per-kernel-row horizontal sums (9 tap multiplies).
    # NOTE: the (Cb,1) tap slices imply a lane-broadcast per use; grid-invariant,
    # expected to be LICM'd by Mosaic (verify in the bundle dump if VALU-bound).
    g = []
    for r in range(3):                                    # r=0,1,2 <-> dh=-1,0,+1
        k0 = 3 * r
        g.append(p[:, k0:k0 + 1] * xm1
                 + p[:, k0 + 1:k0 + 2] * x
                 + p[:, k0 + 2:k0 + 3] * xp1)

    # Combine rows: only the dh=+/-1 partial sums need a roll (+/-W) + row mask.
    y = (pltpu.roll(g[0], shift=W, axis=1) * row_t        # from row h-1
         + g[1]
         + pltpu.roll(g[2], shift=HWp - W, axis=1) * row_b)  # from row h+1
    return y + p[:, 9:10]                                 # conv bias


def _frelu_ln_kernel(x_ref, p_ref, m_ref, o_ref, *, W):
    """conv -> LayerNorm over channels -> affine -> max(x, y). Full-C block."""
    x = x_ref[...].astype(jnp.float32)
    p = p_ref[...]
    y = _dwconv(x, p, m_ref, W)
    mean = jnp.mean(y, axis=0, keepdims=True)             # over C (sublanes)
    var = jnp.mean((y - mean) ** 2, axis=0, keepdims=True)
    y = (y - mean) * lax.rsqrt(var + _EPS)
    y = y * p[:, 10:11] + p[:, 11:12]                     # gamma, beta
    o_ref[...] = jnp.maximum(x, y).astype(o_ref.dtype)


def _bn_stats_kernel(x_ref, p_ref, m_ref, s_ref, ss_ref, *, W):
    """BN pass 1: per-(n, channel-tile) partial sum / sum-of-squares of conv(x).

    Accumulates 128-wide lane-aligned chunks with plain VALU adds; the 128->1
    and over-N reductions happen in the wrapper.  No cross-grid accumulation,
    so both grid axes are safely 'parallel'.
    """
    x = x_ref[...].astype(jnp.float32)
    y = _dwconv(x, p_ref[...], m_ref, W) * m_ref[4:5, :]  # zero the spatial pad
    HWp = y.shape[1]
    c0 = y[:, 0:128]
    s = c0
    ss = c0 * c0
    for j in range(1, HWp // 128):                        # static, lane-aligned
        c = y[:, j * 128:(j + 1) * 128]
        s = s + c
        ss = ss + c * c
    s_ref[...] = s
    ss_ref[...] = ss


def _frelu_fold_kernel(x_ref, p_ref, m_ref, o_ref, *, W):
    """BN pass 2: conv with the BN affine pre-folded into taps/bias, then max."""
    x = x_ref[...].astype(jnp.float32)
    y = _dwconv(x, p_ref[...], m_ref, W)
    o_ref[...] = jnp.maximum(x, y).astype(o_ref.dtype)


def _pack_params(taps, bias, a, b):
    """Pack per-channel params into one (C, 12) array (one DMA, not four)."""
    return jnp.concatenate(
        [taps, bias[:, None], a[:, None], b[:, None]], axis=1
    ).astype(jnp.float32)


def _pick_channel_tile(C, HWp):
    """Largest multiple-of-8 divisor of C whose per-block working set is modest."""
    if C % 8 != 0:
        return C                                  # small / odd channel counts
    budget = 16 << 20                             # keeps blocks v7x-friendly
    per_c = HWp * 4 * 12                          # ~12 live f32 rows per channel
    divs = [d for d in range(8, C + 1, 8) if C % d == 0]
    fitting = [d for d in divs if d * per_c <= budget]
    return max(fitting) if fitting else min(divs)


def _vmem_limit(c_block, hwp, itemsize):
    """Scoped-VMEM request: double-buffered I/O + f32 temporaries + headroom."""
    io = c_block * hwp * itemsize                 # one x block == one out block
    temps = 10 * c_block * hwp * 4                # rolls / row sums / y / max
    misc = 8 * hwp * 4 + c_block * 12 * 4         # masks + packed params
    est = 4 * io + temps + 2 * misc + (4 << 20)
    return int(max(32 << 20, min(est, 64 << 20)))  # 64 MiB = v7x physical cap


@functools.partial(jax.jit, static_argnames=("layer_norm",))
def frelu(x, conv_w, conv_b, gamma, beta, layer_norm=False):
    """FReLU forward.

    x      : (N, C, H, W)   PyTorch NCHW layout (kept as-is)
    conv_w : (C, 1, 3, 3)   depthwise conv weight (torch layout)
    conv_b : (C,)           conv bias
    gamma, beta : (C,)      BN / LN affine parameters
    """
    N, C, H, W = x.shape
    HW = H * W
    HWp = ((HW + 127) // 128) * 128               # lane-dense spatial extent
    itemsize = jnp.dtype(x.dtype).itemsize

    x3 = x.reshape(N, C, HW)                      # free reshape, no transpose
    if HWp != HW:
        x3 = jnp.pad(x3, ((0, 0), (0, 0), (0, HWp - HW)))
    masks = jnp.asarray(_edge_masks(H, W, HWp))   # (8, HWp), fused zero padding
    taps = conv_w.reshape(C, 9).astype(jnp.float32)
    b32 = conv_b.astype(jnp.float32)
    g32 = gamma.astype(jnp.float32)
    be32 = beta.astype(jnp.float32)

    m_spec = pl.BlockSpec((8, HWp), lambda *_: (0, 0))
    # TODO(synk): for very large C*HWp LayerNorm planes (full-C block), add an
    # H-tile grid axis with a 1-row halo (manual DMA / Element index_map) so a
    # single block never exceeds v7x's 64 MiB physical VMEM.

    if layer_norm:
        # LN reduces over channels -> keep full-C blocks, grid over N only.
        params = _pack_params(taps, b32, g32, be32)
        x_spec = pl.BlockSpec((None, C, HWp), lambda n: (n, 0, 0))
        p_spec = pl.BlockSpec((C, 12), lambda *_: (0, 0))
        out3 = pl.pallas_call(
            functools.partial(_frelu_ln_kernel, W=W),
            grid=(N,),
            in_specs=[x_spec, p_spec, m_spec],
            out_specs=x_spec,
            out_shape=jax.ShapeDtypeStruct((N, C, HWp), x.dtype),
            compiler_params=pltpu.CompilerParams(
                dimension_semantics=("parallel",),
                vmem_limit_bytes=_vmem_limit(C, HWp, itemsize)),
        )(x3, params, masks)
    else:
        # Depthwise conv has no cross-channel coupling -> halo-free C tiling.
        Cb = _pick_channel_tile(C, HWp)
        nc = C // Cb
        zeros = jnp.zeros((C,), jnp.float32)
        params_s = _pack_params(taps, b32, zeros, zeros)
        x_spec = pl.BlockSpec((None, Cb, HWp), lambda n, c: (n, c, 0))
        p_spec = pl.BlockSpec((Cb, 12), lambda n, c: (c, 0))
        vlim = _vmem_limit(Cb, HWp, itemsize)

        # ---- pass 1: per-(n, channel-tile) partial batch statistics ----
        stat_spec = pl.BlockSpec((None, Cb, 128), lambda n, c: (n, c, 0))
        s_sum, s_sq = pl.pallas_call(
            functools.partial(_bn_stats_kernel, W=W),
            grid=(N, nc),
            in_specs=[x_spec, p_spec, m_spec],
            out_specs=(stat_spec, stat_spec),
            out_shape=(jax.ShapeDtypeStruct((N, C, 128), jnp.float32),
                       jax.ShapeDtypeStruct((N, C, 128), jnp.float32)),
            compiler_params=pltpu.CompilerParams(
                dimension_semantics=("parallel", "parallel"),
                vmem_limit_bytes=vlim),
        )(x3, params_s, masks)

        # Tiny (N, C, 128)-sized wrapper math; f32 accumulation throughout.
        # TODO(synk): E[y^2]-E[y]^2 can lose precision for |mean| >> std at very
        # large N*HW; switch to a per-channel pre-shift if tolerance demands it.
        cnt = jnp.float32(N * HW)
        s1 = jnp.sum(s_sum, axis=(0, 2))
        s2 = jnp.sum(s_sq, axis=(0, 2))
        mean = s1 / cnt
        var = jnp.maximum(s2 / cnt - mean * mean, 0.0)
        scale = g32 * lax.rsqrt(var + _EPS)       # fold BN affine into the conv
        shift = be32 + (b32 - mean) * scale

        # ---- pass 2: conv with scale folded into taps, shift into bias ----
        params_a = _pack_params(taps * scale[:, None], shift, zeros, zeros)
        out3 = pl.pallas_call(
            functools.partial(_frelu_fold_kernel, W=W),
            grid=(N, nc),
            in_specs=[x_spec, p_spec, m_spec],
            out_specs=x_spec,
            out_shape=jax.ShapeDtypeStruct((N, C, HWp), x.dtype),
            compiler_params=pltpu.CompilerParams(
                dimension_semantics=("parallel", "parallel"),
                vmem_limit_bytes=vlim),
        )(x3, params_a, masks)

    if HWp != HW:
        out3 = out3[:, :, :HW]                    # drop the lane padding once
    return out3.reshape(N, C, H, W)


# ----------------------------- pure-JAX reference ----------------------------
def _frelu_ref(x, conv_w, conv_b, gamma, beta, layer_norm=False):
    N, C, H, W = x.shape
    y = lax.conv_general_dilated(
        x, conv_w, window_strides=(1, 1), padding=((1, 1), (1, 1)),
        dimension_numbers=("NCHW", "OIHW", "NCHW"), feature_group_count=C)
    y = y + conv_b.reshape(1, C, 1, 1)
    if layer_norm:
        mean = jnp.mean(y, axis=1, keepdims=True)
        var = jnp.mean((y - mean) ** 2, axis=1, keepdims=True)
    else:
        mean = jnp.mean(y, axis=(0, 2, 3), keepdims=True)
        var = jnp.mean((y - mean) ** 2, axis=(0, 2, 3), keepdims=True)
    y = (y - mean) / jnp.sqrt(var + _EPS)
    y = y * gamma.reshape(1, C, 1, 1) + beta.reshape(1, C, 1, 1)
    return jnp.maximum(x, y)


if __name__ == "__main__":
    key = jax.random.PRNGKey(0)
    kx, kw, kb, kx2 = jax.random.split(key, 4)

    N, C, H, W = 2, 4, 16, 16
    x = jax.random.normal(kx, (N, C, H, W), dtype=jnp.float32)

    # Deterministic parameter init (shapes from the module's __init__).
    fan_in = 1 * 3 * 3  # depthwise: in_channels/groups * kH * kW
    bound = 1.0 / np.sqrt(fan_in)
    conv_w = jax.random.uniform(kw, (C, 1, 3, 3), jnp.float32, -bound, bound)
    conv_b = jax.random.uniform(kb, (C,), jnp.float32, -bound, bound)
    gamma = jnp.ones((C,), jnp.float32)   # BN / LN weight default init
    beta = jnp.zeros((C,), jnp.float32)   # BN / LN bias default init

    # Default path: BatchNorm2d (training-mode batch stats).
    out_bn = jax.block_until_ready(
        frelu(x, conv_w, conv_b, gamma, beta, layer_norm=False))
    ref_bn = _frelu_ref(x, conv_w, conv_b, gamma, beta, layer_norm=False)
    np.testing.assert_allclose(np.asarray(out_bn), np.asarray(ref_bn),
                               rtol=1e-4, atol=1e-4)

    # layer_norm=True path: LayerNorm over channels.
    out_ln = jax.block_until_ready(
        frelu(x, conv_w, conv_b, gamma, beta, layer_norm=True))
    ref_ln = _frelu_ref(x, conv_w, conv_b, gamma, beta, layer_norm=True)
    np.testing.assert_allclose(np.asarray(out_ln), np.asarray(ref_ln),
                               rtol=1e-4, atol=1e-4)

    # Ragged spatial size (HW = 144, not a multiple of 128) exercises the
    # lane-pad + extended-mask + slice path.
    x2 = jax.random.normal(kx2, (N, C, 12, 12), dtype=jnp.float32)
    out_r = jax.block_until_ready(
        frelu(x2, conv_w, conv_b, gamma, beta, layer_norm=False))
    ref_r = _frelu_ref(x2, conv_w, conv_b, gamma, beta, layer_norm=False)
    np.testing.assert_allclose(np.asarray(out_r), np.asarray(ref_r),
                               rtol=1e-4, atol=1e-4)

    print("KERNEL_OK")
</pallas_src>

<mosaic_0001>
module attributes {stable_mosaic.version = 11 : i64} {
  func.func @_frelu_fold_kernel(%arg0: i32, %arg1: i32, %arg2: memref<1x4x256xf32, #tpu.memory_space<vmem>>, %arg3: memref<4x12xf32, #tpu.memory_space<vmem>>, %arg4: memref<8x256xf32, #tpu.memory_space<vmem>>, %arg5: memref<1x4x256xf32, #tpu.memory_space<vmem>>) attributes {dimension_semantics = [#tpu.dimension_semantics<parallel>, #tpu.dimension_semantics<parallel>], iteration_bounds = array<i64: 2, 1>, scalar_prefetch = 0 : i64, scratch_operands = 0 : i64, tpu.core_type = #tpu.core_type<tc>, window_params = [{transform_indices = @transform_0, window_bounds = array<i64: 1, 4, 256>}, {transform_indices = @transform_1, window_bounds = array<i64: 4, 12>}, {pipeline_mode = #tpu.pipeline_mode<synchronous>, transform_indices = @transform_2, window_bounds = array<i64: 8, 256>}, {transform_indices = @transform_3, window_bounds = array<i64: 1, 4, 256>}]} {
    %c0 = arith.constant 0 : index
    %c0_0 = arith.constant 0 : index
    %c0_1 = arith.constant 0 : index
    %0 = vector.load %arg2[%c0, %c0_0, %c0_1] : memref<1x4x256xf32, #tpu.memory_space<vmem>>, vector<1x4x256xf32>
    %1 = vector.shape_cast %0 : vector<1x4x256xf32> to vector<4x256xf32>
    %c0_2 = arith.constant 0 : index
    %c0_3 = arith.constant 0 : index
    %2 = vector.load %arg3[%c0_2, %c0_3] : memref<4x12xf32, #tpu.memory_space<vmem>>, vector<4x12xf32>
    %c0_4 = arith.constant 0 : index
    %c0_5 = arith.constant 0 : index
    %3 = vector.load %arg4[%c0_4, %c0_5] : memref<8x256xf32, #tpu.memory_space<vmem>>, vector<1x256xf32>
    %c1 = arith.constant 1 : index
    %c0_6 = arith.constant 0 : index
    %4 = vector.load %arg4[%c1, %c0_6] : memref<8x256xf32, #tpu.memory_space<vmem>>, vector<1x256xf32>
    %c2 = arith.constant 2 : index
    %c0_7 = arith.constant 0 : index
    %5 = vector.load %arg4[%c2, %c0_7] : memref<8x256xf32, #tpu.memory_space<vmem>>, vector<1x256xf32>
    %c3 = arith.constant 3 : index
    %c0_8 = arith.constant 0 : index
    %6 = vector.load %arg4[%c3, %c0_8] : memref<8x256xf32, #tpu.memory_space<vmem>>, vector<1x256xf32>
    %c1_i32 = arith.constant 1 : i32
    %7 = tpu.dynamic_rotate %1 by %c1_i32 dim 1 : vector<4x256xf32>, i32 -> vector<4x256xf32>
    %8 = vector.broadcast %3 : vector<1x256xf32> to vector<4x256xf32>
    %9 = arith.mulf %7, %8 : vector<4x256xf32>
    %c255_i32 = arith.constant 255 : i32
    %10 = tpu.dynamic_rotate %1 by %c255_i32 dim 1 : vector<4x256xf32>, i32 -> vector<4x256xf32>
    %11 = vector.broadcast %4 : vector<1x256xf32> to vector<4x256xf32>
    %12 = arith.mulf %10, %11 : vector<4x256xf32>
    %13 = vector.extract_strided_slice %2 {offsets = [0, 0], sizes = [4, 1], strides = [1, 1]} : vector<4x12xf32> to vector<4x1xf32>
    %14 = vector.broadcast %13 : vector<4x1xf32> to vector<4x256xf32>
    %15 = arith.mulf %14, %9 : vector<4x256xf32>
    %16 = vector.extract_strided_slice %2 {offsets = [0, 1], sizes = [4, 1], strides = [1, 1]} : vector<4x12xf32> to vector<4x1xf32>
    %17 = vector.broadcast %16 : vector<4x1xf32> to vector<4x256xf32>
    %18 = arith.mulf %17, %1 : vector<4x256xf32>
    %19 = arith.addf %15, %18 : vector<4x256xf32>
    %20 = vector.extract_strided_slice %2 {offsets = [0, 2], sizes = [4, 1], strides = [1, 1]} : vector<4x12xf32> to vector<4x1xf32>
    %21 = vector.broadcast %20 : vector<4x1xf32> to vector<4x256xf32>
    %22 = arith.mulf %21, %12 : vector<4x256xf32>
    %23 = arith.addf %19, %22 : vector<4x256xf32>
    %24 = vector.extract_strided_slice %2 {offsets = [0, 3], sizes = [4, 1], strides = [1, 1]} : vector<4x12xf32> to vector<4x1xf32>
    %25 = vector.broadcast %24 : vector<4x1xf32> to vector<4x256xf32>
    %26 = arith.mulf %25, %9 : vector<4x256xf32>
    %27 = vector.extract_strided_slice %2 {offsets = [0, 4], sizes = [4, 1], strides = [1, 1]} : vector<4x12xf32> to vector<4x1xf32>
    %28 = vector.broadcast %27 : vector<4x1xf32> to vector<4x256xf32>
    %29 = arith.mulf %28, %1 : vector<4x256xf32>
    %30 = arith.addf %26, %29 : vector<4x256xf32>
    %31 = vector.extract_strided_slice %2 {offsets = [0, 5], sizes = [4, 1], strides = [1, 1]} : vector<4x12xf32> to vector<4x1xf32>
    %32 = vector.broadcast %31 : vector<4x1xf32> to vector<4x256xf32>
    %33 = arith.mulf %32, %12 : vector<4x256xf32>
    %34 = arith.addf %30, %33 : vector<4x256xf32>
    %35 = vector.extract_strided_slice %2 {offsets = [0, 6], sizes = [4, 1], strides = [1, 1]} : vector<4x12xf32> to vector<4x1xf32>
    %36 = vector.broadcast %35 : vector<4x1xf32> to vector<4x256xf32>
    %37 = arith.mulf %36, %9 : vector<4x256xf32>
    %38 = vector.extract_strided_slice %2 {offsets = [0, 7], sizes = [4, 1], strides = [1, 1]} : vector<4x12xf32> to vector<4x1xf32>
    %39 = vector.broadcast %38 : vector<4x1xf32> to vector<4x256xf32>
    %40 = arith.mulf %39, %1 : vector<4x256xf32>
    %41 = arith.addf %37, %40 : vector<4x256xf32>
    %42 = vector.extract_strided_slice %2 {offsets = [0, 8], sizes = [4, 1], strides = [1, 1]} : vector<4x12xf32> to vector<4x1xf32>
    %43 = vector.broadcast %42 : vector<4x1xf32> to vector<4x256xf32>
    %44 = arith.mulf %43, %12 : vector<4x256xf32>
    %45 = arith.addf %41, %44 : vector<4x256xf32>
    %c16_i32 = arith.constant 16 : i32
    %46 = tpu.dynamic_rotate %23 by %c16_i32 dim 1 : vector<4x256xf32>, i32 -> vector<4x256xf32>
    %47 = vector.broadcast %5 : vector<1x256xf32> to vector<4x256xf32>
    %48 = arith.mulf %46, %47 : vector<4x256xf32>
    %49 = arith.addf %48, %34 : vector<4x256xf32>
    %c240_i32 = arith.constant 240 : i32
    %50 = tpu.dynamic_rotate %45 by %c240_i32 dim 1 : vector<4x256xf32>, i32 -> vector<4x256xf32>
    %51 = vector.broadcast %6 : vector<1x256xf32> to vector<4x256xf32>
    %52 = arith.mulf %50, %51 : vector<4x256xf32>
    %53 = arith.addf %49, %52 : vector<4x256xf32>
    %54 = vector.extract_strided_slice %2 {offsets = [0, 9], sizes = [4, 1], strides = [1, 1]} : vector<4x12xf32> to vector<4x1xf32>
    %55 = vector.broadcast %54 : vector<4x1xf32> to vector<4x256xf32>
    %56 = arith.addf %53, %55 : vector<4x256xf32>
    %57 = arith.maximumf %1, %56 : vector<4x256xf32>
    %c0_9 = arith.constant 0 : index
    %c0_10 = arith.constant 0 : index
    %c0_11 = arith.constant 0 : index
    %58 = vector.load %arg5[%c0_9, %c0_10, %c0_11] : memref<1x4x256xf32, #tpu.memory_space<vmem>>, vector<1x4x256xf32>
    %59 = vector.shape_cast %58 : vector<1x4x256xf32> to vector<4x256xf32>
    %60 = vector.shape_cast %57 : vector<4x256xf32> to vector<1x4x256xf32>
    tpu.vector_store %arg5[%c0_9, %c0_10, %c0_11], %60 {strides = array<i32>} : memref<1x4x256xf32, #tpu.memory_space<vmem>>, vector<1x4x256xf32>,
    return
  }
  func.func @transform_0(%arg0: i32, %arg1: i32) -> (i32, i32, i32) {
    %c0_i32 = arith.constant 0 : i32
    %c0_i32_0 = arith.constant 0 : i32
    return %arg0, %arg1, %c0_i32 : i32, i32, i32
  }
  func.func @transform_1(%arg0: i32, %arg1: i32) -> (i32, i32) {
    %c0_i32 = arith.constant 0 : i32
    %c0_i32_0 = arith.constant 0 : i32
    return %arg1, %c0_i32 : i32, i32
  }
  func.func @transform_2(%arg0: i32, %arg1: i32) -> (i32, i32) {
    %c0_i32 = arith.constant 0 : i32
    %c0_i32_0 = arith.constant 0 : i32
    %c0_i32_1 = arith.constant 0 : i32
    return %c0_i32, %c0_i32_0 : i32, i32
  }
  func.func @transform_3(%arg0: i32, %arg1: i32) -> (i32, i32, i32) {
    %c0_i32 = arith.constant 0 : i32
    %c0_i32_0 = arith.constant 0 : i32
    return %arg0, %arg1, %c0_i32 : i32, i32, i32
  }
}

module attributes {stable_mosaic.version = 11 : i64} {
  func.func @_bn_stats_kernel(%arg0: i32, %arg1: i32, %arg2: memref<1x4x256xf32, #tpu.memory_space<vmem>>, %arg3: memref<4x12xf32, #tpu.memory_space<vmem>>, %arg4: memref<8x256xf32, #tpu.memory_space<vmem>>, %arg5: memref<1x4x128xf32, #tpu.memory_space<vmem>>, %arg6: memref<1x4x128xf32, #tpu.memory_space<vmem>>) attributes {dimension_semantics = [#tpu.dimension_semantics<parallel>, #tpu.dimension_semantics<parallel>], iteration_bounds = array<i64: 2, 1>, scalar_prefetch = 0 : i64, scratch_operands = 0 : i64, tpu.core_type = #tpu.core_type<tc>, window_params = [{transform_indices = @transform_0, window_bounds = array<i64: 1, 4, 256>}, {transform_indices = @transform_1, window_bounds = array<i64: 4, 12>}, {pipeline_mode = #tpu.pipeline_mode<synchronous>, transform_indices = @transform_2, window_bounds = array<i64: 8, 256>}, {transform_indices = @transform_3, window_bounds = array<i64: 1, 4, 128>}, {transform_indices = @transform_4, window_bounds = array<i64: 1, 4, 128>}]} {
    %c0 = arith.constant 0 : index
    %c0_0 = arith.constant 0 : index
    %c0_1 = arith.constant 0 : index
    %0 = vector.load %arg2[%c0, %c0_0, %c0_1] : memref<1x4x256xf32, #tpu.memory_space<vmem>>, vector<1x4x256xf32>
    %1 = vector.shape_cast %0 : vector<1x4x256xf32> to vector<4x256xf32>
    %c0_2 = arith.constant 0 : index
    %c0_3 = arith.constant 0 : index
    %2 = vector.load %arg3[%c0_2, %c0_3] : memref<4x12xf32, #tpu.memory_space<vmem>>, vector<4x12xf32>
    %c0_4 = arith.constant 0 : index
    %c0_5 = arith.constant 0 : index
    %3 = vector.load %arg4[%c0_4, %c0_5] : memref<8x256xf32, #tpu.memory_space<vmem>>, vector<1x256xf32>
    %c1 = arith.constant 1 : index
    %c0_6 = arith.constant 0 : index
    %4 = vector.load %arg4[%c1, %c0_6] : memref<8x256xf32, #tpu.memory_space<vmem>>, vector<1x256xf32>
    %c2 = arith.constant 2 : index
    %c0_7 = arith.constant 0 : index
    %5 = vector.load %arg4[%c2, %c0_7] : memref<8x256xf32, #tpu.memory_space<vmem>>, vector<1x256xf32>
    %c3 = arith.constant 3 : index
    %c0_8 = arith.constant 0 : index
    %6 = vector.load %arg4[%c3, %c0_8] : memref<8x256xf32, #tpu.memory_space<vmem>>, vector<1x256xf32>
    %c1_i32 = arith.constant 1 : i32
    %7 = tpu.dynamic_rotate %1 by %c1_i32 dim 1 : vector<4x256xf32>, i32 -> vector<4x256xf32>
    %8 = vector.broadcast %3 : vector<1x256xf32> to vector<4x256xf32>
    %9 = arith.mulf %7, %8 : vector<4x256xf32>
    %c255_i32 = arith.constant 255 : i32
    %10 = tpu.dynamic_rotate %1 by %c255_i32 dim 1 : vector<4x256xf32>, i32 -> vector<4x256xf32>
    %11 = vector.broadcast %4 : vector<1x256xf32> to vector<4x256xf32>
    %12 = arith.mulf %10, %11 : vector<4x256xf32>
    %13 = vector.extract_strided_slice %2 {offsets = [0, 0], sizes = [4, 1], strides = [1, 1]} : vector<4x12xf32> to vector<4x1xf32>
    %14 = vector.broadcast %13 : vector<4x1xf32> to vector<4x256xf32>
    %15 = arith.mulf %14, %9 : vector<4x256xf32>
    %16 = vector.extract_strided_slice %2 {offsets = [0, 1], sizes = [4, 1], strides = [1, 1]} : vector<4x12xf32> to vector<4x1xf32>
    %17 = vector.broadcast %16 : vector<4x1xf32> to vector<4x256xf32>
    %18 = arith.mulf %17, %1 : vector<4x256xf32>
    %19 = arith.addf %15, %18 : vector<4x256xf32>
    %20 = vector.extract_strided_slice %2 {offsets = [0, 2], sizes = [4, 1], strides = [1, 1]} : vector<4x12xf32> to vector<4x1xf32>
    %21 = vector.broadcast %20 : vector<4x1xf32> to vector<4x256xf32>
    %22 = arith.mulf %21, %12 : vector<4x256xf32>
    %23 = arith.addf %19, %22 : vector<4x256xf32>
    %24 = vector.extract_strided_slice %2 {offsets = [0, 3], sizes = [4, 1], strides = [1, 1]} : vector<4x12xf32> to vector<4x1xf32>
    %25 = vector.broadcast %24 : vector<4x1xf32> to vector<4x256xf32>
    %26 = arith.mulf %25, %9 : vector<4x256xf32>
    %27 = vector.extract_strided_slice %2 {offsets = [0, 4], sizes = [4, 1], strides = [1, 1]} : vector<4x12xf32> to vector<4x1xf32>
    %28 = vector.broadcast %27 : vector<4x1xf32> to vector<4x256xf32>
    %29 = arith.mulf %28, %1 : vector<4x256xf32>
    %30 = arith.addf %26, %29 : vector<4x256xf32>
    %31 = vector.extract_strided_slice %2 {offsets = [0, 5], sizes = [4, 1], strides = [1, 1]} : vector<4x12xf32> to vector<4x1xf32>
    %32 = vector.broadcast %31 : vector<4x1xf32> to vector<4x256xf32>
    %33 = arith.mulf %32, %12 : vector<4x256xf32>
    %34 = arith.addf %30, %33 : vector<4x256xf32>
    %35 = vector.extract_strided_slice %2 {offsets = [0, 6], sizes = [4, 1], strides = [1, 1]} : vector<4x12xf32> to vector<4x1xf32>
    %36 = vector.broadcast %35 : vector<4x1xf32> to vector<4x256xf32>
    %37 = arith.mulf %36, %9 : vector<4x256xf32>
    %38 = vector.extract_strided_slice %2 {offsets = [0, 7], sizes = [4, 1], strides = [1, 1]} : vector<4x12xf32> to vector<4x1xf32>
    %39 = vector.broadcast %38 : vector<4x1xf32> to vector<4x256xf32>
    %40 = arith.mulf %39, %1 : vector<4x256xf32>
    %41 = arith.addf %37, %40 : vector<4x256xf32>
    %42 = vector.extract_strided_slice %2 {offsets = [0, 8], sizes = [4, 1], strides = [1, 1]} : vector<4x12xf32> to vector<4x1xf32>
    %43 = vector.broadcast %42 : vector<4x1xf32> to vector<4x256xf32>
    %44 = arith.mulf %43, %12 : vector<4x256xf32>
    %45 = arith.addf %41, %44 : vector<4x256xf32>
    %c16_i32 = arith.constant 16 : i32
    %46 = tpu.dynamic_rotate %23 by %c16_i32 dim 1 : vector<4x256xf32>, i32 -> vector<4x256xf32>
    %47 = vector.broadcast %5 : vector<1x256xf32> to vector<4x256xf32>
    %48 = arith.mulf %46, %47 : vector<4x256xf32>
    %49 = arith.addf %48, %34 : vector<4x256xf32>
    %c240_i32 = arith.constant 240 : i32
    %50 = tpu.dynamic_rotate %45 by %c240_i32 dim 1 : vector<4x256xf32>, i32 -> vector<4x256xf32>
    %51 = vector.broadcast %6 : vector<1x256xf32> to vector<4x256xf32>
    %52 = arith.mulf %50, %51 : vector<4x256xf32>
    %53 = arith.addf %49, %52 : vector<4x256xf32>
    %54 = vector.extract_strided_slice %2 {offsets = [0, 9], sizes = [4, 1], strides = [1, 1]} : vector<4x12xf32> to vector<4x1xf32>
    %55 = vector.broadcast %54 : vector<4x1xf32> to vector<4x256xf32>
    %56 = arith.addf %53, %55 : vector<4x256xf32>
    %c4 = arith.constant 4 : index
    %c0_9 = arith.constant 0 : index
    %57 = vector.load %arg4[%c4, %c0_9] : memref<8x256xf32, #tpu.memory_space<vmem>>, vector<1x256xf32>
    %58 = vector.broadcast %57 : vector<1x256xf32> to vector<4x256xf32>
    %59 = arith.mulf %56, %58 : vector<4x256xf32>
    %60 = vector.extract_strided_slice %59 {offsets = [0, 0], sizes = [4, 128], strides = [1, 1]} : vector<4x256xf32> to vector<4x128xf32>
    %61 = arith.mulf %60, %60 : vector<4x128xf32>
    %62 = vector.extract_strided_slice %59 {offsets = [0, 128], sizes = [4, 128], strides = [1, 1]} : vector<4x256xf32> to vector<4x128xf32>
    %63 = arith.addf %60, %62 : vector<4x128xf32>
    %64 = arith.mulf %62, %62 : vector<4x128xf32>
    %65 = arith.addf %61, %64 : vector<4x128xf32>
    %c0_10 = arith.constant 0 : index
    %c0_11 = arith.constant 0 : index
    %c0_12 = arith.constant 0 : index
    %66 = vector.load %arg5[%c0_10, %c0_11, %c0_12] : memref<1x4x128xf32, #tpu.memory_space<vmem>>, vector<1x4x128xf32>
    %67 = vector.shape_cast %66 : vector<1x4x128xf32> to vector<4x128xf32>
    %68 = vector.shape_cast %63 : vector<4x128xf32> to vector<1x4x128xf32>
    tpu.vector_store %arg5[%c0_10, %c0_11, %c0_12], %68 {strides = array<i32>} : memref<1x4x128xf32, #tpu.memory_space<vmem>>, vector<1x4x128xf32>,
    %c0_13 = arith.constant 0 : index
    %c0_14 = arith.constant 0 : index
    %c0_15 = arith.constant 0 : index
    %69 = vector.load %arg6[%c0_13, %c0_14, %c0_15] : memref<1x4x128xf32, #tpu.memory_space<vmem>>, vector<1x4x128xf32>
    %70 = vector.shape_cast %69 : vector<1x4x128xf32> to vector<4x128xf32>
    %71 = vector.shape_cast %65 : vector<4x128xf32> to vector<1x4x128xf32>
    tpu.vector_store %arg6[%c0_13, %c0_14, %c0_15], %71 {strides = array<i32>} : memref<1x4x128xf32, #tpu.memory_space<vmem>>, vector<1x4x128xf32>,
    return
  }
  func.func @transform_0(%arg0: i32, %arg1: i32) -> (i32, i32, i32) {
    %c0_i32 = arith.constant 0 : i32
    %c0_i32_0 = arith.constant 0 : i32
    return %arg0, %arg1, %c0_i32 : i32, i32, i32
  }
  func.func @transform_1(%arg0: i32, %arg1: i32) -> (i32, i32) {
    %c0_i32 = arith.constant 0 : i32
    %c0_i32_0 = arith.constant 0 : i32
    return %arg1, %c0_i32 : i32, i32
  }
  func.func @transform_2(%arg0: i32, %arg1: i32) -> (i32, i32) {
    %c0_i32 = arith.constant 0 : i32
    %c0_i32_0 = arith.constant 0 : i32
    %c0_i32_1 = arith.constant 0 : i32
    return %c0_i32, %c0_i32_0 : i32, i32
  }
  func.func @transform_3(%arg0: i32, %arg1: i32) -> (i32, i32, i32) {
    %c0_i32 = arith.constant 0 : i32
    %c0_i32_0 = arith.constant 0 : i32
    return %arg0, %arg1, %c0_i32 : i32, i32, i32
  }
  func.func @transform_4(%arg0: i32, %arg1: i32) -> (i32, i32, i32) {
    %c0_i32 = arith.constant 0 : i32
    %c0_i32_0 = arith.constant 0 : i32
    return %arg0, %arg1, %c0_i32 : i32, i32, i32
  }
}

</mosaic_0001>

<llo_original>
// kernel: frelu.2
$region0: #{frelu.2}
  #allocation0 [shape = 'u32[]', space=smem, size = 0x4, offset = 0x4, fixed_abs, tag = 'smem constant byte address 0x4 - core index']
  #allocation1 [shape = 'u32[144,128]{1,0:T(1,128)}', space=vmem, size = 0x12000, scoped, tag = 'internal scratch']
  %s0 = inlined_call_operand.vmem [shape: f32[2,4,256], index: 0, kind: input, shape index: {}]
  %s1 = inlined_call_operand.vmem [shape: f32[4,12], index: 1, kind: input, shape index: {}]
  %s2 = inlined_call_operand.vmem [shape: f32[8,256], index: 2, kind: input, shape index: {}]
  %s3 = inlined_call_operand.vmem [shape: f32[2,4,128], index: 3, kind: output, shape index: {0}]
  %s4 = inlined_call_operand.vmem [shape: f32[2,4,128], index: 4, kind: output, shape index: {1}]
  %5 = xla_tuple %s3, %s4
  %s6 = sld [smem:[#allocation0]]
  $region53: #{frelu.2} parent=0
    _
  %s8 = ssub.s32 1, %s6
  %s9 = scalar_select 0, %s8, %s6
  loop: start=0, step=1, limit=4
  $region2: #{frelu.2} parent=0 // loop_pre_header
    _
  $region3: #{frelu.2} parent=0 // loop_header
    %s11 = sphi 0, %s15
    %p12 = scmp.ge.s32.totalorder %s11, 4
    %s18 = sphi 0, %s30
    %s19 = sphi 0, %s26
    %s20 = sphi 0, %s18
    %s21 = sphi 0, %s19
    %s22 = sphi 0, %s20
    %s23 = sphi 0, %s21
    %s35 = sphi 0, %s37
    %s38 = sphi 0, %s35
    %s39 = sphi 0, %s38
    %s55 = sphi 0, %s39
    %s61 = sphi 0, %s63
    %s64 = sphi 0, %s61
    %s65 = sphi 0, %s64
    %s81 = sphi 0, %s65
    %s85 = sphi 0, %s85
    %s87 = sphi 0, %s85
    %s88 = sphi 0, %s87
    %s102 = sphi 0, %s88
    %s110 = sphi 0, %s112
    %s113 = sphi 0, %s110
    %s114 = sphi 0, %s113
    %s130 = sphi 0, %s114
    %s138 = sphi 0, %s140
    %s141 = sphi 0, %s138
    %s142 = sphi 0, %s141
    %s158 = sphi 0, %s142
  $region4: #{frelu.2} parent=0 // loop_header_branch
    %14 = sbr.rel (%p12) target = $region8
  $region5: #{frelu.2} parent=0 // loop_body
    %s16 = ssub.s32 %s11, 1
    %s17 = ssub.s32 %s11, 2
    %s24 = sadd.s32 1, %s19
    %p25 = scmp.ge.s32.totalorder %s24, 1
    %s26 = scalar_select %p25, 0, %s24
    %s27 = sadd.s32 1, %s18
    %s28 = scalar_select %p25, %s27, %s18
    %p29 = scmp.ge.s32.totalorder %s28, 2
    %s30 = scalar_select %p29, 0, %s28
    %s31 = ssub.s32 %s18, %s30
    %s32 = ssub.s32 %s19, %s26
    %s33 = sor.u32 %s31, %s32
    %p34 = scmp.eq.s32.totalorder %s33, 0
    %s36 = sadd.s32 %s35, 1
    %s37 = scalar_select %p34, %s35, %s36
    %p40 = pneg %p34
    %p41 = scmp.eq.s32.totalorder %s11, 1
    %p42 = por %p40, %p41
    %p43 = scmp.ne.s32.totalorder %s35, %s38
    %p44 = scmp.eq.s32.totalorder %s11, 0
    %p45 = por %p43, %p44
    %p46 = scmp.ne.s32.totalorder %s35, %s38
    %p47 = scmp.eq.s32.totalorder %s16, 1
    %p48 = por %p46, %p47
    %p49 = scmp.ne.s32.totalorder %s38, %s39
    %p50 = scmp.eq.s32.totalorder %s16, 0
    %p51 = por %p49, %p50
    %p52 = scmp.ne.s32.totalorder %s38, %s39
    %p53 = scmp.eq.s32.totalorder %s17, 1
    %p54 = por %p52, %p53
    %p56 = scmp.ne.s32.totalorder %s39, %s55
    %p57 = scmp.eq.s32.totalorder %s17, 0
    %p58 = por %p56, %p57
    %s59 = ssub.s32 %s19, %s26
    %p60 = scmp.eq.s32.totalorder %s59, 0
    %s62 = sadd.s32 %s61, 1
    %s63 = scalar_select %p60, %s61, %s62
    %p66 = pneg %p60
    %p67 = scmp.eq.s32.totalorder %s11, 1
    %p68 = por %p66, %p67
    %p69 = scmp.ne.s32.totalorder %s61, %s64
    %p70 = scmp.eq.s32.totalorder %s11, 0
    %p71 = por %p69, %p70
    %p72 = scmp.ne.s32.totalorder %s61, %s64
    %p73 = scmp.eq.s32.totalorder %s16, 1
    %p74 = por %p72, %p73
    %p75 = scmp.ne.s32.totalorder %s64, %s65
    %p76 = scmp.eq.s32.totalorder %s16, 0
    %p77 = por %p75, %p76
    %p78 = scmp.ne.s32.totalorder %s64, %s65
    %p79 = scmp.eq.s32.totalorder %s17, 1
    %p80 = por %p78, %p79
    %p82 = scmp.ne.s32.totalorder %s65, %s81
    %p83 = scmp.eq.s32.totalorder %s17, 0
    %p84 = por %p82, %p83
    %s86 = sadd.s32 %s85, 1
    %p89 = scmp.eq.s32.totalorder %s11, 1
    %p90 = scmp.ne.s32.totalorder %s85, %s87
    %p91 = scmp.eq.s32.totalorder %s11, 0
    %p92 = por %p90, %p91
    %p93 = scmp.ne.s32.totalorder %s85, %s87
    %p94 = scmp.eq.s32.totalorder %s16, 1
    %p95 = por %p93, %p94
    %p96 = scmp.ne.s32.totalorder %s87, %s88
    %p97 = scmp.eq.s32.totalorder %s16, 0
    %p98 = por %p96, %p97
    %p99 = scmp.ne.s32.totalorder %s87, %s88
    %p100 = scmp.eq.s32.totalorder %s17, 1
    %p101 = por %p99, %p100
    %p103 = scmp.ne.s32.totalorder %s88, %s102
    %p104 = scmp.eq.s32.totalorder %s17, 0
    %p105 = por %p103, %p104
    %s106 = ssub.s32 %s18, %s30
    %s107 = ssub.s32 %s19, %s26
    %s108 = sor.u32 %s106, %s107
    %p109 = scmp.eq.s32.totalorder %s108, 0
    %s111 = sadd.s32 %s110, 1
    %s112 = scalar_select %p109, %s110, %s111
    %p115 = pneg %p109
    %p116 = scmp.eq.s32.totalorder %s11, 1
    %p117 = por %p115, %p116
    %p118 = scmp.ne.s32.totalorder %s110, %s113
    %p119 = scmp.eq.s32.totalorder %s11, 0
    %p120 = por %p118, %p119
    %p121 = scmp.ne.s32.totalorder %s110, %s113
    %p122 = scmp.eq.s32.totalorder %s16, 1
    %p123 = por %p121, %p122
    %p124 = scmp.ne.s32.totalorder %s113, %s114
    %p125 = scmp.eq.s32.totalorder %s16, 0
    %p126 = por %p124, %p125
    %p127 = scmp.ne.s32.totalorder %s113, %s114
    %p128 = scmp.eq.s32.totalorder %s17, 1
    %p129 = por %p127, %p128
    %p131 = scmp.ne.s32.totalorder %s114, %s130
    %p132 = scmp.eq.s32.totalorder %s17, 0
    %p133 = por %p131, %p132
    %s134 = ssub.s32 %s18, %s30
    %s135 = ssub.s32 %s19, %s26
    %s136 = sor.u32 %s134, %s135
    %p137 = scmp.eq.s32.totalorder %s136, 0
    %s139 = sadd.s32 %s138, 1
    %s140 = scalar_select %p137, %s138, %s139
    %p143 = pneg %p137
    %p144 = scmp.eq.s32.totalorder %s11, 1
    %p145 = por %p143, %p144
    %p146 = scmp.ne.s32.totalorder %s138, %s141
    %p147 = scmp.eq.s32.totalorder %s11, 0
    %p148 = por %p146, %p147
    %p149 = scmp.ne.s32.totalorder %s138, %s141
    %p150 = scmp.eq.s32.totalorder %s16, 1
    %p151 = por %p149, %p150
    %p152 = scmp.ne.s32.totalorder %s141, %s142
    %p153 = scmp.eq.s32.totalorder %s16, 0
    %p154 = por %p152, %p153
    %p155 = scmp.ne.s32.totalorder %s141, %s142
    %p156 = scmp.eq.s32.totalorder %s17, 1
    %p157 = por %p155, %p156
    %p159 = scmp.ne.s32.totalorder %s142, %s158
    %p160 = scmp.eq.s32.totalorder %s17, 0
    %p161 = por %p159, %p160
    %p162 = scmp.le.s32.totalorder 1, %s11
    %p163 = scmp.lt.s32.totalorder %s11, 3
    %p164 = pnand %p162, %p163
    %p165 = pneg %p164
    // Predicated region
    $region9: #{frelu.2} parent=5 // pred_check
      _
    $region10: #{frelu.2} parent=5 // pred_check_branch
      %167 = sbr.rel (%p164) target = $region12
    $region11: #{frelu.2} parent=5 // pred_region
      %s168 = ssub.s32 %s11, 1
      // Predicated region
      $region13: #{frelu.2} parent=11 // pred_check
        %p169 = pneg %p77
      $region14: #{frelu.2} parent=11 // pred_check_branch
        %171 = sbr.rel (%p169) target = $region16
      $region15: #{frelu.2} parent=11 // pred_region
        %p172 = scmp.lt.s32.totalorder %s21, 0
        %s173 = scalar_select %p172, %s21, 0
        %s174 = smul.addr %s173, 4
        %s175 = scalar_lea.vmem %s1, %s174
      $region16: #{frelu.2} parent=11 // pred_fallthru
        _
      // Predicated region
      $region17: #{frelu.2} parent=11 // pred_check
        %p176 = pneg %p98
      $region18: #{frelu.2} parent=11 // pred_check_branch
        %178 = sbr.rel (%p176) target = $region20
      $region19: #{frelu.2} parent=11 // pred_region
        _
      $region20: #{frelu.2} parent=11 // pred_fallthru
        _
    $region12: #{frelu.2} parent=5 // pred_fallthru
      _
    %p179 = scmp.lt.s32.totalorder %s11, 2
    // Predicated region
    $region21: #{frelu.2} parent=5 // pred_check
      %p180 = pneg %p179
    $region22: #{frelu.2} parent=5 // pred_check_branch
      %182 = sbr.rel (%p180) target = $region24
    $region23: #{frelu.2} parent=5 // pred_region
      // Predicated region
      $region25: #{frelu.2} parent=23 // pred_check
        %p183 = pneg %p45
      $region26: #{frelu.2} parent=23 // pred_check_branch
        %185 = sbr.rel (%p183) target = $region28
      $region27: #{frelu.2} parent=23 // pred_region
        %p186 = scmp.lt.s32.totalorder %s18, 1
        %s187 = scalar_select %p186, %s18, 1
        %p188 = scmp.lt.s32.totalorder %s19, 0
        %s189 = scalar_select %p188, %s19, 0
        %s190 = smul.addr %s189, 2
        %s191 = smul.addr %s187, 2
        %s192 = sadd.s32 %s190, %s191
        %s193 = smul.addr %s192, 4
        %s194 = scalar_lea.vmem %s0, %s193
      $region28: #{frelu.2} parent=23 // pred_fallthru
        _
    $region24: #{frelu.2} parent=5 // pred_fallthru
      _
    %p195 = scmp.le.s32.totalorder 1, %s11
    %p196 = scmp.lt.s32.totalorder %s11, 3
    %p197 = pnand %p195, %p196
    %p198 = pneg %p197
    // Predicated region
    $region29: #{frelu.2} parent=5 // pred_check
      _
    $region30: #{frelu.2} parent=5 // pred_check_branch
      %200 = sbr.rel (%p197) target = $region32
    $region31: #{frelu.2} parent=5 // pred_region
      %s201 = ssub.s32 %s11, 1
      %p202 = scmp.lt.s32.totalorder %s20, 1
      %s203 = scalar_select %p202, %s20, 1
      %p204 = scmp.lt.s32.totalorder %s21, 0
      %s205 = scalar_select %p204, %s21, 0
      %s206 = smul.addr %s205, 2
      %s207 = smul.addr %s203, 2
      %s208 = sadd.s32 %s206, %s207
      %s209 = smul.addr %s208, 4
      %s210 = scalar_lea.vmem %s0, %s209
      %p211 = pneg %p51
      %p212 = pneg %p48
      %p213 = scmp.lt.s32.totalorder %s21, 0
      %s214 = scalar_select %p213, %s21, 0
      %s215 = smul.addr %s214, 4
      %s216 = scalar_lea.vmem %s1, %s215
      %p217 = pneg %p77
      %p218 = pneg %p74
      %p219 = pneg %p98
      %p220 = pneg %p95
      %p221 = pneg %p126
      %p222 = pneg %p123
      %p223 = scmp.lt.s32.totalorder %s20, 1
      %s224 = scalar_select %p223, %s20, 1
      %p225 = scmp.lt.s32.totalorder %s21, 0
      %s226 = scalar_select %p225, %s21, 0
      %s227 = sadd.s32 %s226, %s224
      %s228 = smul.addr %s227, 4
      %s229 = scalar_lea.vmem %s3, %s228
      %p230 = pneg %p154
      %p231 = pneg %p151
      %p232 = scmp.lt.s32.totalorder %s20, 1
      %s233 = scalar_select %p232, %s20, 1
      %p234 = scmp.lt.s32.totalorder %s21, 0
      %s235 = scalar_select %p234, %s21, 0
      %s236 = sadd.s32 %s235, %s233
      %s237 = smul.addr %s236, 4
      %s238 = scalar_lea.vmem %s4, %s237
      %p239 = scmp.lt.s32.totalorder %s20, 1
      %s240 = scalar_select %p239, %s20, 1
      %p241 = scmp.lt.s32.totalorder %s21, 0
      %s242 = scalar_select %p241, %s21, 0
      %s243 = smul.addr %s242, 2
      %s244 = smul.addr %s240, 2
      %s245 = sadd.s32 %s243, %s244
      %s246 = smul.addr %s245, 4
      %s247 = scalar_lea.vmem %s0, %s246
      %p248 = scmp.lt.s32.totalorder %s21, 0
      %s249 = scalar_select %p248, %s21, 0
      %s250 = smul.addr %s249, 4
      %s251 = scalar_lea.vmem %s1, %s250
      %p252 = scmp.lt.s32.totalorder %s20, 1
      %s253 = scalar_select %p252, %s20, 1
      %p254 = scmp.lt.s32.totalorder %s21, 0
      %s255 = scalar_select %p254, %s21, 0
      %s256 = sadd.s32 %s255, %s253
      %s257 = smul.addr %s256, 4
      %s258 = scalar_lea.vmem %s3, %s257
      %p259 = scmp.lt.s32.totalorder %s20, 1
      %s260 = scalar_select %p259, %s20, 1
      %p261 = scmp.lt.s32.totalorder %s21, 0
      %s262 = scalar_select %p261, %s21, 0
      %s263 = sadd.s32 %s262, %s260
      %s264 = smul.addr %s263, 4
      %s265 = scalar_lea.vmem %s4, %s264
      %v266 = vld [vmem:[%s247] sm:$0xff]
      %v267 = vld [vmem:[%s251] sm:$0xf]
      %v268 = vld [vmem:[%s2] ss:$8 sm:$0x3]
      %s269 = scalar_lea.vmem %s2, 1
      %v270 = vld [vmem:[%s269] ss:$8 sm:$0x3]
      %s271 = scalar_lea.vmem %s2, 2
      %v272 = vld [vmem:[%s271] ss:$8 sm:$0x3]
      %s273 = scalar_lea.vmem %s2, 3
      %v274 = vld [vmem:[%s273] ss:$8 sm:$0x3]
      %v276 = vcombine.high %v266, %v266
      %278 = vrot.lane.b32.xlu0 %v266, 1
      %v279 = vpop.permute.xlu0 %278
      %280 = vrot.lane.b32.xlu0 %v276, 1
      %v281 = vpop.permute.xlu0 %280
      %v282 = vlaneseq
      %v283 = vand.u32 %v282, 127
      %vm284 = vcmp.lt.s32.totalorder %v283, 1
      %v285 = vsel %vm284, %v279, %v281
      %v286 = vsel %vm284, %v281, %v279
      %v288 = vlaneseq
      %v289 = vshrl.u32 %v288, 7
      %v290 = vsub.s32 0, %v289
      %v291 = vrot.slane %v268, %v290
      %v292 = vlaneseq
      %v293 = vshrl.u32 %v292, 7
      %v294 = vsub.s32 1, %v293
      %v295 = vrot.slane %v268, %v294
      %v298 = vmul.f32 %v286, %v291
      %v299 = vmul.f32 %v285, %v295
      %300 = vrot.lane.b32.xlu0 %v266, 127
      %v301 = vpop.permute.xlu0 %300
      %302 = vrot.lane.b32.xlu0 %v276, 127
      %v303 = vpop.permute.xlu0 %302
      %vm304 = vcmp.lt.s32.totalorder %v283, 127
      %v305 = vsel %vm304, %v301, %v303
      %v306 = vsel %vm304, %v303, %v301
      %v308 = vlaneseq
      %v309 = vshrl.u32 %v308, 7
      %v310 = vsub.s32 0, %v309
      %v311 = vrot.slane %v270, %v310
      %v312 = vlaneseq
      %v313 = vshrl.u32 %v312, 7
      %v314 = vsub.s32 1, %v313
      %v315 = vrot.slane %v270, %v314
      %v318 = vmul.f32 %v305, %v311
      %v319 = vmul.f32 %v306, %v315
      %321 = vset.pattern.permute.xlu0 0
      %322 = vperm.xlu0 %321, %v267
      %v323 = vpop.permute.xlu0 %322
      %v325 = vmul.f32 %v323, %v298
      %v326 = vmul.f32 %v323, %v299
      %327 = vset.pattern.permute.xlu0 1
      %328 = vperm.xlu0 %327, %v267
      %v329 = vpop.permute.xlu0 %328
      %v331 = vmul.f32 %v329, %v266
      %v332 = vmul.f32 %v329, %v276
      %v333 = vadd.f32 %v325, %v331
      %v334 = vadd.f32 %v326, %v332
      %335 = vset.pattern.permute.xlu0 2
      %336 = vperm.xlu0 %335, %v267
      %v337 = vpop.permute.xlu0 %336
      %v339 = vmul.f32 %v337, %v318
      %v340 = vmul.f32 %v337, %v319
      %v341 = vadd.f32 %v333, %v339
      %v342 = vadd.f32 %v334, %v340
      %343 = vset.pattern.permute.xlu0 3
      %344 = vperm.xlu0 %343, %v267
      %v345 = vpop.permute.xlu0 %344
      %v347 = vmul.f32 %v345, %v298
      %v348 = vmul.f32 %v345, %v299
      %349 = vset.pattern.permute.xlu0 4
      %350 = vperm.xlu0 %349, %v267
      %v351 = vpop.permute.xlu0 %350
      %v353 = vmul.f32 %v351, %v266
      %v354 = vmul.f32 %v351, %v276
      %v355 = vadd.f32 %v347, %v353
      %v356 = vadd.f32 %v348, %v354
      %357 = vset.pattern.permute.xlu0 5
      %358 = vperm.xlu0 %357, %v267
      %v359 = vpop.permute.xlu0 %358
      %v361 = vmul.f32 %v359, %v318
      %v362 = vmul.f32 %v359, %v319
      %v363 = vadd.f32 %v355, %v361
      %v364 = vadd.f32 %v356, %v362
      %365 = vset.pattern.permute.xlu0 6
      %366 = vperm.xlu0 %365, %v267
      %v367 = vpop.permute.xlu0 %366
      %v369 = vmul.f32 %v367, %v298
      %v370 = vmul.f32 %v367, %v299
      %371 = vset.pattern.permute.xlu0 7
      %372 = vperm.xlu0 %371, %v267
      %v373 = vpop.permute.xlu0 %372
      %v375 = vmul.f32 %v373, %v266
      %v376 = vmul.f32 %v373, %v276
      %v377 = vadd.f32 %v369, %v375
      %v378 = vadd.f32 %v370, %v376
      %379 = vset.pattern.permute.xlu0 8
      %380 = vperm.xlu0 %379, %v267
      %v381 = vpop.permute.xlu0 %380
      %v383 = vmul.f32 %v381, %v318
      %v384 = vmul.f32 %v381, %v319
      %v385 = vadd.f32 %v377, %v383
      %v386 = vadd.f32 %v378, %v384
      %387 = vrot.lane.b32.xlu0 %v341, 16
      %v388 = vpop.permute.xlu0 %387
      %389 = vrot.lane.b32.xlu0 %v342, 16
      %v390 = vpop.permute.xlu0 %389
      %vm391 = vcmp.lt.s32.totalorder %v283, 16
      %v392 = vsel %vm391, %v388, %v390
      %v393 = vsel %vm391, %v390, %v388
      %v395 = vlaneseq
      %v396 = vshrl.u32 %v395, 7
      %v397 = vsub.s32 0, %v396
      %v398 = vrot.slane %v272, %v397
      %v399 = vlaneseq
      %v400 = vshrl.u32 %v399, 7
      %v401 = vsub.s32 1, %v400
      %v402 = vrot.slane %v272, %v401
      %v405 = vmul.f32 %v393, %v398
      %v406 = vmul.f32 %v392, %v402
      %v407 = vadd.f32 %v405, %v363
      %v408 = vadd.f32 %v406, %v364
      %409 = vrot.lane.b32.xlu0 %v385, 112
      %v410 = vpop.permute.xlu0 %409
      %411 = vrot.lane.b32.xlu0 %v386, 112
      %v412 = vpop.permute.xlu0 %411
      %vm413 = vcmp.lt.s32.totalorder %v283, 112
      %v414 = vsel %vm413, %v410, %v412
      %v415 = vsel %vm413, %v412, %v410
      %v417 = vlaneseq
      %v418 = vshrl.u32 %v417, 7
      %v419 = vsub.s32 0, %v418
      %v420 = vrot.slane %v274, %v419
      %v421 = vlaneseq
      %v422 = vshrl.u32 %v421, 7
      %v423 = vsub.s32 1, %v422
      %v424 = vrot.slane %v274, %v423
      %v427 = vmul.f32 %v414, %v420
      %v428 = vmul.f32 %v415, %v424
      %v429 = vadd.f32 %v407, %v427
      %v430 = vadd.f32 %v408, %v428
      %431 = vset.pattern.permute.xlu0 9
      %432 = vperm.xlu0 %431, %v267
      %v433 = vpop.permute.xlu0 %432
      %v435 = vadd.f32 %v429, %v433
      %v436 = vadd.f32 %v430, %v433
      %s437 = scalar_lea.vmem %s2, 4
      %v438 = vld [vmem:[%s437] ss:$8 sm:$0x3]
      %v440 = vlaneseq
      %v441 = vshrl.u32 %v440, 7
      %v442 = vsub.s32 0, %v441
      %v443 = vrot.slane %v438, %v442
      %v444 = vlaneseq
      %v445 = vshrl.u32 %v444, 7
      %v446 = vsub.s32 1, %v445
      %v447 = vrot.slane %v438, %v446
      %v450 = vmul.f32 %v435, %v443
      %v451 = vmul.f32 %v436, %v447
      %v452 = vmul.f32 %v450, %v450
      %v453 = vadd.f32 %v450, %v451
      %v454 = vmul.f32 %v451, %v451
      %v455 = vadd.f32 %v452, %v454
      %456 = vst [vmem:[%s258] sm:$0xf] %v453
      %457 = vst [vmem:[%s265] sm:$0xf] %v455
      %p458 = scmp.lt.s32.totalorder %s20, 1
      %s459 = scalar_select %p458, %s20, 1
      %p460 = scmp.lt.s32.totalorder %s21, 0
      %s461 = scalar_select %p460, %s21, 0
      %s462 = sadd.s32 %s461, %s459
      %s463 = smul.addr %s462, 4
      %s464 = scalar_lea.vmem %s3, %s463
      %p465 = scmp.lt.s32.totalorder %s20, 1
      %s466 = scalar_select %p465, %s20, 1
      %p467 = scmp.lt.s32.totalorder %s21, 0
      %s468 = scalar_select %p467, %s21, 0
      %s469 = sadd.s32 %s468, %s466
      %s470 = smul.addr %s469, 4
      %s471 = scalar_lea.vmem %s4, %s470
      // Predicated region
      $region33: #{frelu.2} parent=31 // pred_check
        %p472 = pneg %p123
      $region34: #{frelu.2} parent=31 // pred_check_branch
        %474 = sbr.rel (%p472) target = $region36
      $region35: #{frelu.2} parent=31 // pred_region
        _
      $region36: #{frelu.2} parent=31 // pred_fallthru
        _
      // Predicated region
      $region37: #{frelu.2} parent=31 // pred_check
        %p475 = pneg %p151
      $region38: #{frelu.2} parent=31 // pred_check_branch
        %477 = sbr.rel (%p475) target = $region40
      $region39: #{frelu.2} parent=31 // pred_region
        _
      $region40: #{frelu.2} parent=31 // pred_fallthru
        _
    $region32: #{frelu.2} parent=5 // pred_fallthru
      _
    %p478 = scmp.le.s32.totalorder 2, %s11
    // Predicated region
    $region41: #{frelu.2} parent=5 // pred_check
      %p479 = pneg %p478
    $region42: #{frelu.2} parent=5 // pred_check_branch
      %481 = sbr.rel (%p479) target = $region44
    $region43: #{frelu.2} parent=5 // pred_region
      %s482 = ssub.s32 %s11, 2
      // Predicated region
      $region45: #{frelu.2} parent=43 // pred_check
        %p483 = pneg %p129
      $region46: #{frelu.2} parent=43 // pred_check_branch
        %485 = sbr.rel (%p483) target = $region48
      $region47: #{frelu.2} parent=43 // pred_region
        %p486 = scmp.lt.s32.totalorder %s22, 1
        %s487 = scalar_select %p486, %s22, 1
        %p488 = scmp.lt.s32.totalorder %s23, 0
        %s489 = scalar_select %p488, %s23, 0
        %s490 = sadd.s32 %s489, %s487
        %s491 = smul.addr %s490, 4
        %s492 = scalar_lea.vmem %s3, %s491
      $region48: #{frelu.2} parent=43 // pred_fallthru
        _
      // Predicated region
      $region49: #{frelu.2} parent=43 // pred_check
        %p493 = pneg %p157
      $region50: #{frelu.2} parent=43 // pred_check_branch
        %495 = sbr.rel (%p493) target = $region52
      $region51: #{frelu.2} parent=43 // pred_region
        %p496 = scmp.lt.s32.totalorder %s22, 1
        %s497 = scalar_select %p496, %s22, 1
        %p498 = scmp.lt.s32.totalorder %s23, 0
        %s499 = scalar_select %p498, %s23, 0
        %s500 = sadd.s32 %s499, %s497
        %s501 = smul.addr %s500, 4
        %s502 = scalar_lea.vmem %s4, %s501
      $region52: #{frelu.2} parent=43 // pred_fallthru
        _
    $region44: #{frelu.2} parent=5 // pred_fallthru
      _
  $region6: #{frelu.2} parent=0 // loop_footer
    %s15 = sadd.s32 1, %s11
  $region7: #{frelu.2} parent=0 // loop_footer_branch
    %10 = sbr.rel target = $region3
  $region8: #{frelu.2} parent=0 // loop_exit
    _

// kernel: frelu.3
$region0: #{frelu.3}
  #allocation0 [shape = 'u32[]', space=smem, size = 0x4, offset = 0x4, fixed_abs, tag = 'smem constant byte address 0x4 - core index']
  #allocation1 [shape = 'u32[144,128]{1,0:T(1,128)}', space=vmem, size = 0x12000, scoped, tag = 'internal scratch']
  %s0 = inlined_call_operand.vmem [shape: f32[2,4,256], index: 0, kind: input, shape index: {}]
  %s1 = inlined_call_operand.vmem [shape: f32[4,12], index: 1, kind: input, shape index: {}]
  %s2 = inlined_call_operand.vmem [shape: f32[8,256], index: 2, kind: input, shape index: {}]
  %s3 = inlined_call_operand.vmem [shape: f32[2,4,256], index: 3, kind: output, shape index: {}]
  %s4 = sld [smem:[#allocation0]]
  $region45: #{frelu.3} parent=0
    _
  %s6 = ssub.s32 1, %s4
  %s7 = scalar_select 0, %s6, %s4
  loop: start=0, step=1, limit=4
  $region2: #{frelu.3} parent=0 // loop_pre_header
    _
  $region3: #{frelu.3} parent=0 // loop_header
    %s9 = sphi 0, %s13
    %p10 = scmp.ge.s32.totalorder %s9, 4
    %s16 = sphi 0, %s28
    %s17 = sphi 0, %s24
    %s18 = sphi 0, %s16
    %s19 = sphi 0, %s17
    %s20 = sphi 0, %s18
    %s21 = sphi 0, %s19
    %s33 = sphi 0, %s35
    %s36 = sphi 0, %s33
    %s37 = sphi 0, %s36
    %s53 = sphi 0, %s37
    %s59 = sphi 0, %s61
    %s62 = sphi 0, %s59
    %s63 = sphi 0, %s62
    %s79 = sphi 0, %s63
    %s83 = sphi 0, %s83
    %s85 = sphi 0, %s83
    %s86 = sphi 0, %s85
    %s100 = sphi 0, %s86
    %s108 = sphi 0, %s110
    %s111 = sphi 0, %s108
    %s112 = sphi 0, %s111
    %s128 = sphi 0, %s112
  $region4: #{frelu.3} parent=0 // loop_header_branch
    %12 = sbr.rel (%p10) target = $region8
  $region5: #{frelu.3} parent=0 // loop_body
    %s14 = ssub.s32 %s9, 1
    %s15 = ssub.s32 %s9, 2
    %s22 = sadd.s32 1, %s17
    %p23 = scmp.ge.s32.totalorder %s22, 1
    %s24 = scalar_select %p23, 0, %s22
    %s25 = sadd.s32 1, %s16
    %s26 = scalar_select %p23, %s25, %s16
    %p27 = scmp.ge.s32.totalorder %s26, 2
    %s28 = scalar_select %p27, 0, %s26
    %s29 = ssub.s32 %s16, %s28
    %s30 = ssub.s32 %s17, %s24
    %s31 = sor.u32 %s29, %s30
    %p32 = scmp.eq.s32.totalorder %s31, 0
    %s34 = sadd.s32 %s33, 1
    %s35 = scalar_select %p32, %s33, %s34
    %p38 = pneg %p32
    %p39 = scmp.eq.s32.totalorder %s9, 1
    %p40 = por %p38, %p39
    %p41 = scmp.ne.s32.totalorder %s33, %s36
    %p42 = scmp.eq.s32.totalorder %s9, 0
    %p43 = por %p41, %p42
    %p44 = scmp.ne.s32.totalorder %s33, %s36
    %p45 = scmp.eq.s32.totalorder %s14, 1
    %p46 = por %p44, %p45
    %p47 = scmp.ne.s32.totalorder %s36, %s37
    %p48 = scmp.eq.s32.totalorder %s14, 0
    %p49 = por %p47, %p48
    %p50 = scmp.ne.s32.totalorder %s36, %s37
    %p51 = scmp.eq.s32.totalorder %s15, 1
    %p52 = por %p50, %p51
    %p54 = scmp.ne.s32.totalorder %s37, %s53
    %p55 = scmp.eq.s32.totalorder %s15, 0
    %p56 = por %p54, %p55
    %s57 = ssub.s32 %s17, %s24
    %p58 = scmp.eq.s32.totalorder %s57, 0
    %s60 = sadd.s32 %s59, 1
    %s61 = scalar_select %p58, %s59, %s60
    %p64 = pneg %p58
    %p65 = scmp.eq.s32.totalorder %s9, 1
    %p66 = por %p64, %p65
    %p67 = scmp.ne.s32.totalorder %s59, %s62
    %p68 = scmp.eq.s32.totalorder %s9, 0
    %p69 = por %p67, %p68
    %p70 = scmp.ne.s32.totalorder %s59, %s62
    %p71 = scmp.eq.s32.totalorder %s14, 1
    %p72 = por %p70, %p71
    %p73 = scmp.ne.s32.totalorder %s62, %s63
    %p74 = scmp.eq.s32.totalorder %s14, 0
    %p75 = por %p73, %p74
    %p76 = scmp.ne.s32.totalorder %s62, %s63
    %p77 = scmp.eq.s32.totalorder %s15, 1
    %p78 = por %p76, %p77
    %p80 = scmp.ne.s32.totalorder %s63, %s79
    %p81 = scmp.eq.s32.totalorder %s15, 0
    %p82 = por %p80, %p81
    %s84 = sadd.s32 %s83, 1
    %p87 = scmp.eq.s32.totalorder %s9, 1
    %p88 = scmp.ne.s32.totalorder %s83, %s85
    %p89 = scmp.eq.s32.totalorder %s9, 0
    %p90 = por %p88, %p89
    %p91 = scmp.ne.s32.totalorder %s83, %s85
    %p92 = scmp.eq.s32.totalorder %s14, 1
    %p93 = por %p91, %p92
    %p94 = scmp.ne.s32.totalorder %s85, %s86
    %p95 = scmp.eq.s32.totalorder %s14, 0
    %p96 = por %p94, %p95
    %p97 = scmp.ne.s32.totalorder %s85, %s86
    %p98 = scmp.eq.s32.totalorder %s15, 1
    %p99 = por %p97, %p98
    %p101 = scmp.ne.s32.totalorder %s86, %s100
    %p102 = scmp.eq.s32.totalorder %s15, 0
    %p103 = por %p101, %p102
    %s104 = ssub.s32 %s16, %s28
    %s105 = ssub.s32 %s17, %s24
    %s106 = sor.u32 %s104, %s105
    %p107 = scmp.eq.s32.totalorder %s106, 0
    %s109 = sadd.s32 %s108, 1
    %s110 = scalar_select %p107, %s108, %s109
    %p113 = pneg %p107
    %p114 = scmp.eq.s32.totalorder %s9, 1
    %p115 = por %p113, %p114
    %p116 = scmp.ne.s32.totalorder %s108, %s111
    %p117 = scmp.eq.s32.totalorder %s9, 0
    %p118 = por %p116, %p117
    %p119 = scmp.ne.s32.totalorder %s108, %s111
    %p120 = scmp.eq.s32.totalorder %s14, 1
    %p121 = por %p119, %p120
    %p122 = scmp.ne.s32.totalorder %s111, %s112
    %p123 = scmp.eq.s32.totalorder %s14, 0
    %p124 = por %p122, %p123
    %p125 = scmp.ne.s32.totalorder %s111, %s112
    %p126 = scmp.eq.s32.totalorder %s15, 1
    %p127 = por %p125, %p126
    %p129 = scmp.ne.s32.totalorder %s112, %s128
    %p130 = scmp.eq.s32.totalorder %s15, 0
    %p131 = por %p129, %p130
    %p132 = scmp.le.s32.totalorder 1, %s9
    %p133 = scmp.lt.s32.totalorder %s9, 3
    %p134 = pnand %p132, %p133
    %p135 = pneg %p134
    // Predicated region
    $region9: #{frelu.3} parent=5 // pred_check
      _
    $region10: #{frelu.3} parent=5 // pred_check_branch
      %137 = sbr.rel (%p134) target = $region12
    $region11: #{frelu.3} parent=5 // pred_region
      %s138 = ssub.s32 %s9, 1
      // Predicated region
      $region13: #{frelu.3} parent=11 // pred_check
        %p139 = pneg %p75
      $region14: #{frelu.3} parent=11 // pred_check_branch
        %141 = sbr.rel (%p139) target = $region16
      $region15: #{frelu.3} parent=11 // pred_region
        %p142 = scmp.lt.s32.totalorder %s19, 0
        %s143 = scalar_select %p142, %s19, 0
        %s144 = smul.addr %s143, 4
        %s145 = scalar_lea.vmem %s1, %s144
      $region16: #{frelu.3} parent=11 // pred_fallthru
        _
      // Predicated region
      $region17: #{frelu.3} parent=11 // pred_check
        %p146 = pneg %p96
      $region18: #{frelu.3} parent=11 // pred_check_branch
        %148 = sbr.rel (%p146) target = $region20
      $region19: #{frelu.3} parent=11 // pred_region
        _
      $region20: #{frelu.3} parent=11 // pred_fallthru
        _
    $region12: #{frelu.3} parent=5 // pred_fallthru
      _
    %p149 = scmp.lt.s32.totalorder %s9, 2
    // Predicated region
    $region21: #{frelu.3} parent=5 // pred_check
      %p150 = pneg %p149
    $region22: #{frelu.3} parent=5 // pred_check_branch
      %152 = sbr.rel (%p150) target = $region24
    $region23: #{frelu.3} parent=5 // pred_region
      // Predicated region
      $region25: #{frelu.3} parent=23 // pred_check
        %p153 = pneg %p43
      $region26: #{frelu.3} parent=23 // pred_check_branch
        %155 = sbr.rel (%p153) target = $region28
      $region27: #{frelu.3} parent=23 // pred_region
        %p156 = scmp.lt.s32.totalorder %s16, 1
        %s157 = scalar_select %p156, %s16, 1
        %p158 = scmp.lt.s32.totalorder %s17, 0
        %s159 = scalar_select %p158, %s17, 0
        %s160 = smul.addr %s159, 2
        %s161 = smul.addr %s157, 2
        %s162 = sadd.s32 %s160, %s161
        %s163 = smul.addr %s162, 4
        %s164 = scalar_lea.vmem %s0, %s163
      $region28: #{frelu.3} parent=23 // pred_fallthru
        _
    $region24: #{frelu.3} parent=5 // pred_fallthru
      _
    %p165 = scmp.le.s32.totalorder 1, %s9
    %p166 = scmp.lt.s32.totalorder %s9, 3
    %p167 = pnand %p165, %p166
    %p168 = pneg %p167
    // Predicated region
    $region29: #{frelu.3} parent=5 // pred_check
      _
    $region30: #{frelu.3} parent=5 // pred_check_branch
      %170 = sbr.rel (%p167) target = $region32
    $region31: #{frelu.3} parent=5 // pred_region
      %s171 = ssub.s32 %s9, 1
      %p172 = scmp.lt.s32.totalorder %s18, 1
      %s173 = scalar_select %p172, %s18, 1
      %p174 = scmp.lt.s32.totalorder %s19, 0
      %s175 = scalar_select %p174, %s19, 0
      %s176 = smul.addr %s175, 2
      %s177 = smul.addr %s173, 2
      %s178 = sadd.s32 %s176, %s177
      %s179 = smul.addr %s178, 4
      %s180 = scalar_lea.vmem %s0, %s179
      %p181 = pneg %p49
      %p182 = pneg %p46
      %p183 = scmp.lt.s32.totalorder %s19, 0
      %s184 = scalar_select %p183, %s19, 0
      %s185 = smul.addr %s184, 4
      %s186 = scalar_lea.vmem %s1, %s185
      %p187 = pneg %p75
      %p188 = pneg %p72
      %p189 = pneg %p96
      %p190 = pneg %p93
      %p191 = pneg %p124
      %p192 = pneg %p121
      %p193 = scmp.lt.s32.totalorder %s18, 1
      %s194 = scalar_select %p193, %s18, 1
      %p195 = scmp.lt.s32.totalorder %s19, 0
      %s196 = scalar_select %p195, %s19, 0
      %s197 = smul.addr %s196, 2
      %s198 = smul.addr %s194, 2
      %s199 = sadd.s32 %s197, %s198
      %s200 = smul.addr %s199, 4
      %s201 = scalar_lea.vmem %s3, %s200
      %p202 = scmp.lt.s32.totalorder %s18, 1
      %s203 = scalar_select %p202, %s18, 1
      %p204 = scmp.lt.s32.totalorder %s19, 0
      %s205 = scalar_select %p204, %s19, 0
      %s206 = smul.addr %s205, 2
      %s207 = smul.addr %s203, 2
      %s208 = sadd.s32 %s206, %s207
      %s209 = smul.addr %s208, 4
      %s210 = scalar_lea.vmem %s0, %s209
      %p211 = scmp.lt.s32.totalorder %s19, 0
      %s212 = scalar_select %p211, %s19, 0
      %s213 = smul.addr %s212, 4
      %s214 = scalar_lea.vmem %s1, %s213
      %p215 = scmp.lt.s32.totalorder %s18, 1
      %s216 = scalar_select %p215, %s18, 1
      %p217 = scmp.lt.s32.totalorder %s19, 0
      %s218 = scalar_select %p217, %s19, 0
      %s219 = smul.addr %s218, 2
      %s220 = smul.addr %s216, 2
      %s221 = sadd.s32 %s219, %s220
      %s222 = smul.addr %s221, 4
      %s223 = scalar_lea.vmem %s3, %s222
      %v224 = vld [vmem:[%s210] sm:$0xff]
      %v225 = vld [vmem:[%s214] sm:$0xf]
      %v226 = vld [vmem:[%s2] ss:$8 sm:$0x3]
      %s227 = scalar_lea.vmem %s2, 1
      %v228 = vld [vmem:[%s227] ss:$8 sm:$0x3]
      %s229 = scalar_lea.vmem %s2, 2
      %v230 = vld [vmem:[%s229] ss:$8 sm:$0x3]
      %s231 = scalar_lea.vmem %s2, 3
      %v232 = vld [vmem:[%s231] ss:$8 sm:$0x3]
      %v234 = vcombine.high %v224, %v224
      %236 = vrot.lane.b32.xlu0 %v224, 1
      %v237 = vpop.permute.xlu0 %236
      %238 = vrot.lane.b32.xlu0 %v234, 1
      %v239 = vpop.permute.xlu0 %238
      %v240 = vlaneseq
      %v241 = vand.u32 %v240, 127
      %vm242 = vcmp.lt.s32.totalorder %v241, 1
      %v243 = vsel %vm242, %v237, %v239
      %v244 = vsel %vm242, %v239, %v237
      %v246 = vlaneseq
      %v247 = vshrl.u32 %v246, 7
      %v248 = vsub.s32 0, %v247
      %v249 = vrot.slane %v226, %v248
      %v250 = vlaneseq
      %v251 = vshrl.u32 %v250, 7
      %v252 = vsub.s32 1, %v251
      %v253 = vrot.slane %v226, %v252
      %v256 = vmul.f32 %v244, %v249
      %v257 = vmul.f32 %v243, %v253
      %258 = vrot.lane.b32.xlu0 %v224, 127
      %v259 = vpop.permute.xlu0 %258
      %260 = vrot.lane.b32.xlu0 %v234, 127
      %v261 = vpop.permute.xlu0 %260
      %vm262 = vcmp.lt.s32.totalorder %v241, 127
      %v263 = vsel %vm262, %v259, %v261
      %v264 = vsel %vm262, %v261, %v259
      %v266 = vlaneseq
      %v267 = vshrl.u32 %v266, 7
      %v268 = vsub.s32 0, %v267
      %v269 = vrot.slane %v228, %v268
      %v270 = vlaneseq
      %v271 = vshrl.u32 %v270, 7
      %v272 = vsub.s32 1, %v271
      %v273 = vrot.slane %v228, %v272
      %v276 = vmul.f32 %v263, %v269
      %v277 = vmul.f32 %v264, %v273
      %279 = vset.pattern.permute.xlu0 0
      %280 = vperm.xlu0 %279, %v225
      %v281 = vpop.permute.xlu0 %280
      %v283 = vmul.f32 %v281, %v256
      %v284 = vmul.f32 %v281, %v257
      %285 = vset.pattern.permute.xlu0 1
      %286 = vperm.xlu0 %285, %v225
      %v287 = vpop.permute.xlu0 %286
      %v289 = vmul.f32 %v287, %v224
      %v290 = vmul.f32 %v287, %v234
      %v291 = vadd.f32 %v283, %v289
      %v292 = vadd.f32 %v284, %v290
      %293 = vset.pattern.permute.xlu0 2
      %294 = vperm.xlu0 %293, %v225
      %v295 = vpop.permute.xlu0 %294
      %v297 = vmul.f32 %v295, %v276
      %v298 = vmul.f32 %v295, %v277
      %v299 = vadd.f32 %v291, %v297
      %v300 = vadd.f32 %v292, %v298
      %301 = vset.pattern.permute.xlu0 3
      %302 = vperm.xlu0 %301, %v225
      %v303 = vpop.permute.xlu0 %302
      %v305 = vmul.f32 %v303, %v256
      %v306 = vmul.f32 %v303, %v257
      %307 = vset.pattern.permute.xlu0 4
      %308 = vperm.xlu0 %307, %v225
      %v309 = vpop.permute.xlu0 %308
      %v311 = vmul.f32 %v309, %v224
      %v312 = vmul.f32 %v309, %v234
      %v313 = vadd.f32 %v305, %v311
      %v314 = vadd.f32 %v306, %v312
      %315 = vset.pattern.permute.xlu0 5
      %316 = vperm.xlu0 %315, %v225
      %v317 = vpop.permute.xlu0 %316
      %v319 = vmul.f32 %v317, %v276
      %v320 = vmul.f32 %v317, %v277
      %v321 = vadd.f32 %v313, %v319
      %v322 = vadd.f32 %v314, %v320
      %323 = vset.pattern.permute.xlu0 6
      %324 = vperm.xlu0 %323, %v225
      %v325 = vpop.permute.xlu0 %324
      %v327 = vmul.f32 %v325, %v256
      %v328 = vmul.f32 %v325, %v257
      %329 = vset.pattern.permute.xlu0 7
      %330 = vperm.xlu0 %329, %v225
      %v331 = vpop.permute.xlu0 %330
      %v333 = vmul.f32 %v331, %v224
      %v334 = vmul.f32 %v331, %v234
      %v335 = vadd.f32 %v327, %v333
      %v336 = vadd.f32 %v328, %v334
      %337 = vset.pattern.permute.xlu0 8
      %338 = vperm.xlu0 %337, %v225
      %v339 = vpop.permute.xlu0 %338
      %v341 = vmul.f32 %v339, %v276
      %v342 = vmul.f32 %v339, %v277
      %v343 = vadd.f32 %v335, %v341
      %v344 = vadd.f32 %v336, %v342
      %345 = vrot.lane.b32.xlu0 %v299, 16
      %v346 = vpop.permute.xlu0 %345
      %347 = vrot.lane.b32.xlu0 %v300, 16
      %v348 = vpop.permute.xlu0 %347
      %vm349 = vcmp.lt.s32.totalorder %v241, 16
      %v350 = vsel %vm349, %v346, %v348
      %v351 = vsel %vm349, %v348, %v346
      %v353 = vlaneseq
      %v354 = vshrl.u32 %v353, 7
      %v355 = vsub.s32 0, %v354
      %v356 = vrot.slane %v230, %v355
      %v357 = vlaneseq
      %v358 = vshrl.u32 %v357, 7
      %v359 = vsub.s32 1, %v358
      %v360 = vrot.slane %v230, %v359
      %v363 = vmul.f32 %v351, %v356
      %v364 = vmul.f32 %v350, %v360
      %v365 = vadd.f32 %v363, %v321
      %v366 = vadd.f32 %v364, %v322
      %367 = vrot.lane.b32.xlu0 %v343, 112
      %v368 = vpop.permute.xlu0 %367
      %369 = vrot.lane.b32.xlu0 %v344, 112
      %v370 = vpop.permute.xlu0 %369
      %vm371 = vcmp.lt.s32.totalorder %v241, 112
      %v372 = vsel %vm371, %v368, %v370
      %v373 = vsel %vm371, %v370, %v368
      %v375 = vlaneseq
      %v376 = vshrl.u32 %v375, 7
      %v377 = vsub.s32 0, %v376
      %v378 = vrot.slane %v232, %v377
      %v379 = vlaneseq
      %v380 = vshrl.u32 %v379, 7
      %v381 = vsub.s32 1, %v380
      %v382 = vrot.slane %v232, %v381
      %v385 = vmul.f32 %v372, %v378
      %v386 = vmul.f32 %v373, %v382
      %v387 = vadd.f32 %v365, %v385
      %v388 = vadd.f32 %v366, %v386
      %389 = vset.pattern.permute.xlu0 9
      %390 = vperm.xlu0 %389, %v225
      %v391 = vpop.permute.xlu0 %390
      %v393 = vadd.f32 %v387, %v391
      %v394 = vadd.f32 %v388, %v391
      %v397 = vcombine.low %v393, %v394
      %v399 = vmax.f32 %v224, %v397
      %400 = vst [vmem:[%s223] sm:$0xff] %v399
      %p401 = scmp.lt.s32.totalorder %s18, 1
      %s402 = scalar_select %p401, %s18, 1
      %p403 = scmp.lt.s32.totalorder %s19, 0
      %s404 = scalar_select %p403, %s19, 0
      %s405 = smul.addr %s404, 2
      %s406 = smul.addr %s402, 2
      %s407 = sadd.s32 %s405, %s406
      %s408 = smul.addr %s407, 4
      %s409 = scalar_lea.vmem %s3, %s408
      // Predicated region
      $region33: #{frelu.3} parent=31 // pred_check
        %p410 = pneg %p121
      $region34: #{frelu.3} parent=31 // pred_check_branch
        %412 = sbr.rel (%p410) target = $region36
      $region35: #{frelu.3} parent=31 // pred_region
        _
      $region36: #{frelu.3} parent=31 // pred_fallthru
        _
    $region32: #{frelu.3} parent=5 // pred_fallthru
      _
    %p413 = scmp.le.s32.totalorder 2, %s9
    // Predicated region
    $region37: #{frelu.3} parent=5 // pred_check
      %p414 = pneg %p413
    $region38: #{frelu.3} parent=5 // pred_check_branch
      %416 = sbr.rel (%p414) target = $region40
    $region39: #{frelu.3} parent=5 // pred_region
      %s417 = ssub.s32 %s9, 2
      // Predicated region
      $region41: #{frelu.3} parent=39 // pred_check
        %p418 = pneg %p127
      $region42: #{frelu.3} parent=39 // pred_check_branch
        %420 = sbr.rel (%p418) target = $region44
      $region43: #{frelu.3} parent=39 // pred_region
        %p421 = scmp.lt.s32.totalorder %s20, 1
        %s422 = scalar_select %p421, %s20, 1
        %p423 = scmp.lt.s32.totalorder %s21, 0
        %s424 = scalar_select %p423, %s21, 0
        %s425 = smul.addr %s424, 2
        %s426 = smul.addr %s422, 2
        %s427 = sadd.s32 %s425, %s426
        %s428 = smul.addr %s427, 4
        %s429 = scalar_lea.vmem %s3, %s428
      $region44: #{frelu.3} parent=39 // pred_fallthru
        _
    $region40: #{frelu.3} parent=5 // pred_fallthru
      _
  $region6: #{frelu.3} parent=0 // loop_footer
    %s13 = sadd.s32 1, %s9
  $region7: #{frelu.3} parent=0 // loop_footer_branch
    %8 = sbr.rel target = $region3
  $region8: #{frelu.3} parent=0 // loop_exit
    _

</llo_original>
